<compile_context>
chip_gen: v7x
topology: tpu7x:2x2x1
jax: 0.10.0
libtpu: 0.0.40
codegen_flags: <defaults>
</compile_context>

<pallas_src>
import jax
import jax.numpy as jnp
from jax.experimental import pallas as pl
from jax.experimental.pallas import tpu as pltpu


def _dp_replica_kernel(w_ref, b_ref, x_ref, o_ref):
    """One DataParallel replica: wrapped 1x1-conv module applied to its shard.

    w_ref: (Cout, Cin)        VMEM  -- replicated weights
    b_ref: (Cout, 1)          VMEM  -- replicated bias (column for lane broadcast)
    x_ref: (shard_b, Cin, HW) VMEM  -- this replica's batch shard (HW on lanes)
    o_ref: (shard_b, Cout, HW)VMEM  -- this replica's output shard (gather on dim 0)
    """
    shard_b, _, hw = x_ref.shape
    cout = o_ref.shape[1]

    w = w_ref[...]                                        # (Cout, Cin)
    # Hoist the bias broadcast out of the per-batch loop (JAX does not CSE it).
    bias_row = jnp.broadcast_to(b_ref[...], (cout, hw))   # (Cout, HW)

    def apply_one(b):
        # Whole (Cout, HW) output slab from one small MXU dot -> one dense,
        # unmasked full-tile store (no per-channel masked row writes).
        y = jnp.dot(w, x_ref[b], preferred_element_type=jnp.float32)  # (Cout, HW)
        o_ref[b] = (y + bias_row).astype(o_ref.dtype)

    if shard_b <= 8:
        # Short fixed trip count: unroll at trace time (LLO scheduler visibility).
        for b in range(shard_b):
            apply_one(b)
    else:
        # TODO(synk): for very large shard_b * HW also tile HW (BlockSpec or an
        # inner chunked loop) to keep live slabs within the 64-vreg file.
        def body(b, carry):
            apply_one(b)
            return carry

        jax.lax.fori_loop(0, shard_b, body, 0)


def data_parallel_conv1x1(x_nchw, weight, bias, *, num_devices=2):
    """DataParallel(Conv2d(Cin, Cout, 1)).forward(x) implemented with Pallas.

    x_nchw: (B, Cin, H, W) float32  (PyTorch NCHW convention)
    weight: (Cout, Cin, 1, 1)       (PyTorch Conv2d weight layout)
    bias:   (Cout,)
    returns (B, Cout, H, W)
    """
    B, Cin, H, W = x_nchw.shape
    Cout = weight.shape[0]
    HW = H * W
    itemsize = jnp.dtype(x_nchw.dtype).itemsize

    # Grid coarsening: only split into per-device grid steps once a shard is
    # big enough (>= 512 KiB of I/O) to amortize per-step overhead + DMA setup.
    # Otherwise collapse the "device" axis into a single grid step; the batch
    # split then lives purely inside the block (semantics are identical since
    # scatter -> apply -> gather of a pointwise module equals one full apply).
    splittable = num_devices > 1 and B % num_devices == 0
    per_shard_bytes = (
        (B // num_devices) * (Cin + Cout) * HW * itemsize if splittable else 0
    )
    if splittable and per_shard_bytes >= (512 << 10):
        n_steps = num_devices
        dim_sem = ("parallel",)   # independent replicas -> megacore-shardable
    else:
        n_steps = 1
        dim_sem = ("arbitrary",)  # tiny work: avoid cross-TC split overhead
    shard_b = B // n_steps
    # TODO(synk): ragged batch (B % num_devices != 0) at the grid level would
    # need pl.cdiv + masking; here it simply falls back to the collapsed grid.

    # Lane-dense, transpose-free layout: spatial axis last (HW on lanes).
    x_p = x_nchw.reshape(B, Cin, HW)
    w_mat = weight.reshape(Cout, Cin)
    b_col = bias.reshape(Cout, 1)

    cost = pl.CostEstimate(
        flops=2 * B * HW * Cin * Cout,
        transcendentals=0,
        bytes_accessed=(B * Cin * HW + B * Cout * HW) * itemsize
        + (Cout * Cin + Cout) * 4,
    )

    out_p = pl.pallas_call(
        _dp_replica_kernel,
        out_shape=jax.ShapeDtypeStruct((B, Cout, HW), x_nchw.dtype),
        grid_spec=pltpu.PrefetchScalarGridSpec(
            num_scalar_prefetch=0,
            grid=(n_steps,),  # one grid step per "device" replica (or 1 if collapsed)
            in_specs=[
                # replicate: parameters visible (same block) to every replica
                pl.BlockSpec((Cout, Cin), lambda d: (0, 0)),   # weight (VMEM, MXU path)
                pl.BlockSpec((Cout, 1), lambda d: (0, 0)),     # bias
                # scatter: each replica sees its own batch shard (lane-dense HW)
                pl.BlockSpec((shard_b, Cin, HW), lambda d: (d, 0, 0)),
            ],
            # gather: replica d writes output shard d (concat along dim 0)
            out_specs=pl.BlockSpec((shard_b, Cout, HW), lambda d: (d, 0, 0)),
        ),
        compiler_params=pltpu.CompilerParams(dimension_semantics=dim_sem),
        cost_estimate=cost,
    )(w_mat, b_col, x_p)

    # Back to NCHW — a pure reshape, no transpose needed.
    return out_p.reshape(B, Cout, H, W)


if __name__ == "__main__":
    # Deterministic parameter init (shapes implied by the wrapped Conv2d module).
    key = jax.random.PRNGKey(0)
    kx, kw, kb = jax.random.split(key, 3)

    B, Cin, H, W = 2, 4, 16, 16
    Cout = 8
    num_devices = 2  # DataParallel(device_ids=[0, 1]) analogue: batch split in 2

    x = jax.random.normal(kx, (B, Cin, H, W), dtype=jnp.float32)
    weight = jax.random.normal(kw, (Cout, Cin, 1, 1), dtype=jnp.float32) * 0.1
    bias = jax.random.normal(kb, (Cout,), dtype=jnp.float32) * 0.1

    out = data_parallel_conv1x1(x, weight, bias, num_devices=num_devices)
    out = jax.block_until_ready(out)

    # Pure-JAX reference of the wrapped module applied to the full batch
    # (DataParallel scatter->apply->gather is numerically identical to this).
    ref = (
        jnp.einsum("bchw,oc->bohw", x, weight.reshape(Cout, Cin))
        + bias[None, :, None, None]
    )
    assert out.shape == (B, Cout, H, W)
    assert jnp.allclose(out, ref, atol=1e-5, rtol=1e-5)

    # TODO(synk): true multi-device replication/threading (replicate/parallel_apply
    # across physical accelerators) is a host-level concern with no single-kernel
    # Pallas equivalent; here the per-device replicas are grid steps of one kernel
    # (collapsed to a single step when shards are too small to amortize overhead).
    print("KERNEL_OK")
</pallas_src>

<mosaic_0001>
module attributes {stable_mosaic.version = 11 : i64} {
  func.func @_dp_replica_kernel(%arg0: i32, %arg1: memref<8x4xf32, #tpu.memory_space<vmem>>, %arg2: memref<8x1xf32, #tpu.memory_space<vmem>>, %arg3: memref<2x4x256xf32, #tpu.memory_space<vmem>>, %arg4: memref<2x8x256xf32, #tpu.memory_space<vmem>>) attributes {dimension_semantics = [#tpu.dimension_semantics<arbitrary>], iteration_bounds = array<i64: 1>, scalar_prefetch = 0 : i64, scratch_operands = 0 : i64, tpu.core_type = #tpu.core_type<tc>, window_params = [{pipeline_mode = #tpu.pipeline_mode<synchronous>, transform_indices = @transform_0, window_bounds = array<i64: 8, 4>}, {pipeline_mode = #tpu.pipeline_mode<synchronous>, transform_indices = @transform_1, window_bounds = array<i64: 8, 1>}, {transform_indices = @transform_2, window_bounds = array<i64: 2, 4, 256>}, {transform_indices = @transform_3, window_bounds = array<i64: 2, 8, 256>}]} {
    %c0 = arith.constant 0 : index
    %c0_0 = arith.constant 0 : index
    %0 = vector.load %arg1[%c0, %c0_0] : memref<8x4xf32, #tpu.memory_space<vmem>>, vector<8x4xf32>
    %c0_1 = arith.constant 0 : index
    %c0_2 = arith.constant 0 : index
    %1 = vector.load %arg2[%c0_1, %c0_2] : memref<8x1xf32, #tpu.memory_space<vmem>>, vector<8x1xf32>
    %2 = vector.shape_cast %1 : vector<8x1xf32> to vector<8x1xf32>
    %3 = vector.broadcast %2 : vector<8x1xf32> to vector<8x256xf32>
    %c0_3 = arith.constant 0 : index
    %c0_4 = arith.constant 0 : index
    %c0_5 = arith.constant 0 : index
    %4 = vector.load %arg3[%c0_3, %c0_4, %c0_5] : memref<2x4x256xf32, #tpu.memory_space<vmem>>, vector<1x4x256xf32>
    %5 = vector.shape_cast %4 : vector<1x4x256xf32> to vector<4x256xf32>
    %cst = arith.constant dense<0.000000e+00> : vector<8x256xf32>
    %6 = tpu.matmul %0, %5, %cst {dimension_numbers = #tpu.dot_dimension_numbers<[1], [0], [0], [1], [0, 0, 1, 1], [], []>} : vector<8x4xf32>, vector<4x256xf32>, vector<8x256xf32> -> vector<8x256xf32>
    %7 = arith.addf %6, %3 : vector<8x256xf32>
    %c0_6 = arith.constant 0 : index
    %c0_7 = arith.constant 0 : index
    %c0_8 = arith.constant 0 : index
    %8 = vector.load %arg4[%c0_6, %c0_7, %c0_8] : memref<2x8x256xf32, #tpu.memory_space<vmem>>, vector<1x8x256xf32>
    %9 = vector.shape_cast %8 : vector<1x8x256xf32> to vector<8x256xf32>
    %10 = vector.shape_cast %7 : vector<8x256xf32> to vector<1x8x256xf32>
    tpu.vector_store %arg4[%c0_6, %c0_7, %c0_8], %10 {strides = array<i32>} : memref<2x8x256xf32, #tpu.memory_space<vmem>>, vector<1x8x256xf32>,
    %c1 = arith.constant 1 : index
    %c0_9 = arith.constant 0 : index
    %c0_10 = arith.constant 0 : index
    %11 = vector.load %arg3[%c1, %c0_9, %c0_10] : memref<2x4x256xf32, #tpu.memory_space<vmem>>, vector<1x4x256xf32>
    %12 = vector.shape_cast %11 : vector<1x4x256xf32> to vector<4x256xf32>
    %cst_11 = arith.constant dense<0.000000e+00> : vector<8x256xf32>
    %13 = tpu.matmul %0, %12, %cst_11 {dimension_numbers = #tpu.dot_dimension_numbers<[1], [0], [0], [1], [0, 0, 1, 1], [], []>} : vector<8x4xf32>, vector<4x256xf32>, vector<8x256xf32> -> vector<8x256xf32>
    %14 = arith.addf %13, %3 : vector<8x256xf32>
    %c1_12 = arith.constant 1 : index
    %c0_13 = arith.constant 0 : index
    %c0_14 = arith.constant 0 : index
    %15 = vector.load %arg4[%c1_12, %c0_13, %c0_14] : memref<2x8x256xf32, #tpu.memory_space<vmem>>, vector<1x8x256xf32>
    %16 = vector.shape_cast %15 : vector<1x8x256xf32> to vector<8x256xf32>
    %17 = vector.shape_cast %14 : vector<8x256xf32> to vector<1x8x256xf32>
    tpu.vector_store %arg4[%c1_12, %c0_13, %c0_14], %17 {strides = array<i32>} : memref<2x8x256xf32, #tpu.memory_space<vmem>>, vector<1x8x256xf32>,
    return
  }
  func.func @transform_0(%arg0: i32) -> (i32, i32) {
    %c0_i32 = arith.constant 0 : i32
    %c0_i32_0 = arith.constant 0 : i32
    %c0_i32_1 = arith.constant 0 : i32
    return %c0_i32, %c0_i32_0 : i32, i32
  }
  func.func @transform_1(%arg0: i32) -> (i32, i32) {
    %c0_i32 = arith.constant 0 : i32
    %c0_i32_0 = arith.constant 0 : i32
    %c0_i32_1 = arith.constant 0 : i32
    return %c0_i32, %c0_i32_0 : i32, i32
  }
  func.func @transform_2(%arg0: i32) -> (i32, i32, i32) {
    %c0_i32 = arith.constant 0 : i32
    %c0_i32_0 = arith.constant 0 : i32
    %c0_i32_1 = arith.constant 0 : i32
    return %arg0, %c0_i32, %c0_i32_0 : i32, i32, i32
  }
  func.func @transform_3(%arg0: i32) -> (i32, i32, i32) {
    %c0_i32 = arith.constant 0 : i32
    %c0_i32_0 = arith.constant 0 : i32
    %c0_i32_1 = arith.constant 0 : i32
    return %arg0, %c0_i32, %c0_i32_0 : i32, i32, i32
  }
}

</mosaic_0001>

<llo_original>
// kernel: tpu_custom_call.1
$region0: #{tpu_custom_call.1}
  #allocation0 [shape = 'u32[]', space=smem, size = 0x4, offset = 0x4, fixed_abs, tag = 'smem constant byte address 0x4 - core index']
  #allocation1 [shape = 'u32[144,128]{1,0:T(1,128)}', space=vmem, size = 0x12000, scoped, tag = 'internal scratch']
  %s0 = inlined_call_operand.vmem [shape: f32[8,4], index: 0, kind: input, shape index: {}]
  %s1 = inlined_call_operand.vmem [shape: f32[8,1], index: 1, kind: input, shape index: {}]
  %s2 = inlined_call_operand.vmem [shape: f32[2,4,256], index: 2, kind: input, shape index: {}]
  %s3 = inlined_call_operand.hbm [shape: f32[2,8,256], index: 3, kind: output, shape index: {}]
  %s4 = sld [smem:[#allocation0]]
  $region22: #{tpu_custom_call.1} parent=0
    _
  %s6 = ssub.s32 1, %s4
  %s7 = scalar_select 0, %s6, %s4
  $region1: #{tpu_custom_call.1} parent=0
    #allocation2 [shape = 'u8[16384]{0}', space=vmem, size = 0x4000, scoped, tag = 'output window, operand 0, single buffered']
    #allocation3 [shape = 's32[1]{0}', space=sflag, size = 0x4, scoped, tag = 'scoped memory for tpu_custom_call.1']
    %8 = vsyncpa [#allocation3], 0
    // Predicated region
    $region2: #{tpu_custom_call.1} parent=1 // pred_check
      _
    $region3: #{tpu_custom_call.1} parent=1 // pred_check_branch
      %10 = sbr.rel (0) target = $region5
    $region4: #{tpu_custom_call.1} parent=1 // pred_region
      _
    $region5: #{tpu_custom_call.1} parent=1 // pred_fallthru
      _
    // Predicated region
    $region6: #{tpu_custom_call.1} parent=1 // pred_check
      _
    $region7: #{tpu_custom_call.1} parent=1 // pred_check_branch
      %12 = sbr.rel (0) target = $region9
    $region8: #{tpu_custom_call.1} parent=1 // pred_region
      _
    $region9: #{tpu_custom_call.1} parent=1 // pred_fallthru
      _
    // Predicated region
    $region10: #{tpu_custom_call.1} parent=1 // pred_check
      _
    $region11: #{tpu_custom_call.1} parent=1 // pred_check_branch
      %14 = sbr.rel (0) target = $region13
    $region12: #{tpu_custom_call.1} parent=1 // pred_region
      _
    $region13: #{tpu_custom_call.1} parent=1 // pred_fallthru
      _
    %v15 = vld [vmem:[%s0] sm:$0xff]
    %v16 = vld [vmem:[%s1] sm:$0xff]
    %18 = vset.pattern.permute.xlu0 0
    %19 = vperm.xlu0 %18, %v16
    %v20 = vpop.permute.xlu0 %19
    %v22 = vld [vmem:[%s2] sm:$0xff]
    %v24 = vcombine.high %v22, %v22
    %vm25 = vcmask 31744
    %v27 = vsel %vm25, %v15, 0
    %vm29 = vcmask 1043456
    %v30 = vsel %vm29, %v22, 0
    %v32 = vsel %vm29, %v24, 0
    %34 = vmatprep.subr.mxu0 %v32
    %35 = vmatpush1.msra.mxu0 %v30
    %36 = vmatprep.subr.mxu0 0.0
    %37 = vmatpush1.msra.mxu0 0.0
    %38 = vmatprep.subr.mxu0 0.0
    %39 = vmatpush1.msra.mxu0 0.0
    %40 = vmatprep.subr.mxu0 0.0
    %41 = vmatpush1.msra.mxu0 0.0
    %42 = vmatprep.subr.mxu0 0.0
    %43 = vmatpush1.msra.mxu0 0.0
    %44 = vmatprep.subr.mxu0 0.0
    %45 = vmatpush1.msra.mxu0 0.0
    %46 = vmatprep.subr.mxu0 0.0
    %47 = vmatpush1.msra.mxu0 0.0
    %48 = vmatprep.subr.mxu0 0.0
    %49 = vmatpush1.msra.mxu0 0.0
    %50 = vmatprep.subr.mxu0 0.0
    %51 = vmatpush1.msra.mxu0 0.0
    %52 = vmatprep.subr.mxu0 0.0
    %53 = vmatpush1.msra.mxu0 0.0
    %54 = vmatprep.subr.mxu0 0.0
    %55 = vmatpush1.msra.mxu0 0.0
    %56 = vmatprep.subr.mxu0 0.0
    %57 = vmatpush1.msra.mxu0 0.0
    %58 = vmatprep.subr.mxu0 0.0
    %59 = vmatpush1.msra.mxu0 0.0
    %60 = vmatprep.subr.mxu0 0.0
    %61 = vmatpush1.msra.mxu0 0.0
    %62 = vmatprep.subr.mxu0 0.0
    %63 = vmatpush1.msra.mxu0 0.0
    %64 = vmatprep.subr.mxu0 0.0
    %65 = vmatpush1.msra.mxu0 0.0
    %66 = vmatprep.subr.mxu0 0.0
    %67 = vmatpush1.msra.mxu0 0.0
    %68 = vmatprep.subr.mxu0 0.0
    %69 = vmatpush1.msra.mxu0 0.0
    %70 = vmatprep.subr.mxu0 0.0
    %71 = vmatpush1.msra.mxu0 0.0
    %72 = vmatprep.subr.mxu0 0.0
    %73 = vmatpush1.msra.mxu0 0.0
    %74 = vmatprep.subr.mxu0 0.0
    %75 = vmatpush1.msra.mxu0 0.0
    %76 = vmatprep.subr.mxu0 0.0
    %77 = vmatpush1.msra.mxu0 0.0
    %78 = vmatprep.subr.mxu0 0.0
    %79 = vmatpush1.msra.mxu0 0.0
    %80 = vmatprep.subr.mxu0 0.0
    %81 = vmatpush1.msra.mxu0 0.0
    %82 = vmatprep.subr.mxu0 0.0
    %83 = vmatpush1.msra.mxu0 0.0
    %84 = vmatprep.subr.mxu0 0.0
    %85 = vmatpush1.msra.mxu0 0.0
    %86 = vmatprep.subr.mxu0 0.0
    %87 = vmatpush1.msra.mxu0 0.0
    %88 = vmatprep.subr.mxu0 0.0
    %89 = vmatpush1.msra.mxu0 0.0
    %90 = vmatprep.subr.mxu0 0.0
    %91 = vmatpush1.msra.mxu0 0.0
    %92 = vmatprep.subr.mxu0 0.0
    %93 = vmatpush1.msra.mxu0 0.0
    %94 = vmatprep.subr.mxu0 0.0
    %95 = vmatpush1.msra.mxu0 0.0
    %96 = vmatprep.subr.mxu0 0.0
    %97 = vmatpush1.msra.mxu0 0.0
    %98 = vmatprep.mubr.f32.mxu0 0.0
    %99 = vmatmul.mubr.f32.gmra.mrb[0].mxu0 %v27
    %v100 = vpop.f32.mrb[0].mxu0
    %v101 = vadd.f32 %v20, %v100
    %v102 = vpop.f32.mrb[0].mxu0
    %v103 = vadd.f32 %v20, %v102
    %104 = vdwg.mxu0
    %105 = vst [vmem:[#allocation2] sm:$0xff] %v101
    %106 = vst [vmem:[#allocation2 + $0x8] sm:$0xff] %v103
    %s107 = scalar_lea.vmem %s2, 8
    %v108 = vld [vmem:[%s107] sm:$0xff]
    %v110 = vcombine.high %v108, %v108
    %v111 = vsel %vm29, %v108, 0
    %v113 = vsel %vm29, %v110, 0
    %115 = vmatprep.subr.mxu0 %v113
    %116 = vmatpush1.msra.mxu0 %v111
    %117 = vmatprep.subr.mxu0 0.0
    %118 = vmatpush1.msra.mxu0 0.0
    %119 = vmatprep.subr.mxu0 0.0
    %120 = vmatpush1.msra.mxu0 0.0
    %121 = vmatprep.subr.mxu0 0.0
    %122 = vmatpush1.msra.mxu0 0.0
    %123 = vmatprep.subr.mxu0 0.0
    %124 = vmatpush1.msra.mxu0 0.0
    %125 = vmatprep.subr.mxu0 0.0
    %126 = vmatpush1.msra.mxu0 0.0
    %127 = vmatprep.subr.mxu0 0.0
    %128 = vmatpush1.msra.mxu0 0.0
    %129 = vmatprep.subr.mxu0 0.0
    %130 = vmatpush1.msra.mxu0 0.0
    %131 = vmatprep.subr.mxu0 0.0
    %132 = vmatpush1.msra.mxu0 0.0
    %133 = vmatprep.subr.mxu0 0.0
    %134 = vmatpush1.msra.mxu0 0.0
    %135 = vmatprep.subr.mxu0 0.0
    %136 = vmatpush1.msra.mxu0 0.0
    %137 = vmatprep.subr.mxu0 0.0
    %138 = vmatpush1.msra.mxu0 0.0
    %139 = vmatprep.subr.mxu0 0.0
    %140 = vmatpush1.msra.mxu0 0.0
    %141 = vmatprep.subr.mxu0 0.0
    %142 = vmatpush1.msra.mxu0 0.0
    %143 = vmatprep.subr.mxu0 0.0
    %144 = vmatpush1.msra.mxu0 0.0
    %145 = vmatprep.subr.mxu0 0.0
    %146 = vmatpush1.msra.mxu0 0.0
    %147 = vmatprep.subr.mxu0 0.0
    %148 = vmatpush1.msra.mxu0 0.0
    %149 = vmatprep.subr.mxu0 0.0
    %150 = vmatpush1.msra.mxu0 0.0
    %151 = vmatprep.subr.mxu0 0.0
    %152 = vmatpush1.msra.mxu0 0.0
    %153 = vmatprep.subr.mxu0 0.0
    %154 = vmatpush1.msra.mxu0 0.0
    %155 = vmatprep.subr.mxu0 0.0
    %156 = vmatpush1.msra.mxu0 0.0
    %157 = vmatprep.subr.mxu0 0.0
    %158 = vmatpush1.msra.mxu0 0.0
    %159 = vmatprep.subr.mxu0 0.0
    %160 = vmatpush1.msra.mxu0 0.0
    %161 = vmatprep.subr.mxu0 0.0
    %162 = vmatpush1.msra.mxu0 0.0
    %163 = vmatprep.subr.mxu0 0.0
    %164 = vmatpush1.msra.mxu0 0.0
    %165 = vmatprep.subr.mxu0 0.0
    %166 = vmatpush1.msra.mxu0 0.0
    %167 = vmatprep.subr.mxu0 0.0
    %168 = vmatpush1.msra.mxu0 0.0
    %169 = vmatprep.subr.mxu0 0.0
    %170 = vmatpush1.msra.mxu0 0.0
    %171 = vmatprep.subr.mxu0 0.0
    %172 = vmatpush1.msra.mxu0 0.0
    %173 = vmatprep.subr.mxu0 0.0
    %174 = vmatpush1.msra.mxu0 0.0
    %175 = vmatprep.subr.mxu0 0.0
    %176 = vmatpush1.msra.mxu0 0.0
    %177 = vmatprep.subr.mxu0 0.0
    %178 = vmatpush1.msra.mxu0 0.0
    %179 = vmatprep.mubr.f32.mxu0 0.0
    %180 = vmatmul.mubr.f32.gmra.mrb[0].mxu0 %v27
    %v181 = vpop.f32.mrb[0].mxu0
    %v182 = vadd.f32 %v20, %v181
    %v183 = vpop.f32.mrb[0].mxu0
    %v184 = vadd.f32 %v20, %v183
    %185 = vdwg.mxu0
    %s186 = scalar_lea.vmem [#allocation2], 16
    %187 = vst [vmem:[%s186] sm:$0xff] %v182
    %188 = vst [vmem:[%s186 + $0x8] sm:$0xff] %v184
    // Predicated region
    $region14: #{tpu_custom_call.1} parent=1 // pred_check
      _
    $region15: #{tpu_custom_call.1} parent=1 // pred_check_branch
      %190 = sbr.rel (0) target = $region17
    $region16: #{tpu_custom_call.1} parent=1 // pred_region
      %s192 = ssub.s32 512, 512
      %193 = vsyncadd [#allocation3], %s192
      %s194 = sshll.u32 [#allocation2], 4
      %s195 = int_to_ptr.vmem [resolvable:$true] %s194
      %200 = dma.vmem_to_hbm [thread:$0]  %s195, 512, %s3, [#allocation3], 256, 256, 16
    $region17: #{tpu_custom_call.1} parent=1 // pred_fallthru
      _
    // Predicated region
    $region18: #{tpu_custom_call.1} parent=1 // pred_check
      _
    $region19: #{tpu_custom_call.1} parent=1 // pred_check_branch
      %202 = sbr.rel (0) target = $region21
    $region20: #{tpu_custom_call.1} parent=1 // pred_region
      %203 = dma.done [#allocation3], 512
    $region21: #{tpu_custom_call.1} parent=1 // pred_fallthru
      _
    %204 = vsyncpa [#allocation3], 1

</llo_original>
